<compile_context>
chip_gen: v6e
topology: v6e:2x2x1
jax: 0.10.0
libtpu: 0.0.40
codegen_flags: <defaults>
</compile_context>

<pallas_src>
import jax
import jax.numpy as jnp
from jax import lax
from jax.experimental import pallas as pl
from jax.experimental.pallas import tpu as pltpu


def _round_up(x, m):
    return (x + m - 1) // m * m


def ad_user_kernel(uid_ref, aid_ref, utab_ref, atab_ref, fcw_ref, fcb_ref,
                   out_ref, u_rows, a_rows):
    """One grid step == one batch tile of TB rows.

    uid_ref / aid_ref : (B_pad,) int32 SMEM (scalar prefetch)
    utab_ref          : (Vu, E) VMEM-resident user embedding table
    atab_ref          : (Va, E) VMEM-resident ad embedding table
    fcw_ref / fcb_ref : (1,)    SMEM scalars (Linear(1,1) weight / bias)
    out_ref           : (TB, 1) output block for this tile
    u_rows / a_rows   : (TB, E) f32 VMEM scratch (gathered rows)
    """
    TB = out_ref.shape[0]
    base = pl.program_id(0) * TB

    # ---- gather: TB user rows + TB ad rows into VMEM scratch -------------
    # Scalar-indexed VMEM row copies inside a single grid step: no per-row
    # grid overhead and no per-row HBM DMA descriptors.  Every scratch row is
    # rewritten each tile, so there is no stale data across grid iterations.
    @pl.loop(0, TB)
    def _gather(r):
        uid = uid_ref[base + r]
        aid = aid_ref[base + r]
        u_rows[pl.ds(r, 1), :] = utab_ref[pl.ds(uid, 1), :].astype(jnp.float32)
        a_rows[pl.ds(r, 1), :] = atab_ref[pl.ds(aid, 1), :].astype(jnp.float32)

    # ---- vectorized normalize + dot + fc + sigmoid over the whole tile ----
    u = u_rows[...]                                   # (TB, E) f32
    a = a_rows[...]                                   # (TB, E) f32

    raw = jnp.sum(u * a, axis=-1, keepdims=True)      # (TB, 1)
    nu2 = jnp.sum(u * u, axis=-1, keepdims=True)
    na2 = jnp.sum(a * a, axis=-1, keepdims=True)

    # F.normalize(p=2, dim=1, eps=1e-12) fused with the dot product:
    #   cos = <u,a> * rsqrt(max(|u|^2, eps^2)) * rsqrt(max(|a|^2, eps^2))
    # valid because max(||x||, eps) == sqrt(max(||x||^2, eps^2)) for ||x||>=0
    # (keep sums in f32 if tables ever become bf16).
    eps2 = jnp.float32(1e-24)
    scale = lax.rsqrt(jnp.maximum(nu2, eps2)) * lax.rsqrt(jnp.maximum(na2, eps2))
    cos = raw * scale                                 # (TB, 1)

    # fc: Linear(1, 1) + sigmoid, once per tile (scalars hoisted from SMEM).
    w = fcw_ref[0]
    b = fcb_ref[0]
    out_ref[...] = jax.nn.sigmoid(cos * w + b)        # (TB, 1)


def ad_user_forward(user_ids, ad_ids, user_table, ad_table, fc_w, fc_b):
    """Wrapper: id clamp/pad + layout plumbing + pallas_call."""
    B = user_ids.shape[0]
    Vu, E = user_table.shape
    Va, Ea = ad_table.shape
    assert Ea == E

    # Residency budget (sized against v7x's 64 MiB physical VMEM with headroom
    # for double-buffered output + scratch).
    table_bytes = (user_table.size * user_table.dtype.itemsize
                   + ad_table.size * ad_table.dtype.itemsize)
    assert table_bytes <= 24 * 1024 * 1024, (
        "tables too large for VMEM residency; use the batched HBM-DMA gather path")

    # Full 128-lane batch tiles; padded rows are gathered from id 0 and dropped.
    # (On v7x, batches >128 naturally give num_tiles>=2 so both TensorCores work.)
    TB = 128
    B_pad = _round_up(max(B, 1), TB)
    num_tiles = B_pad // TB

    # Clamp ids (avoid OOB gathers) and pad the batch.
    uid = jnp.clip(user_ids.astype(jnp.int32), 0, Vu - 1)
    aid = jnp.clip(ad_ids.astype(jnp.int32), 0, Va - 1)
    uid = jnp.zeros((B_pad,), jnp.int32).at[:B].set(uid)
    aid = jnp.zeros((B_pad,), jnp.int32).at[:B].set(aid)

    # Tables passed in their stored dtype (no wrapper-side whole-table cast);
    # the kernel casts the gathered rows to f32.
    fcw = fc_w.reshape(-1).astype(jnp.float32)[:1]
    fcb = fc_b.reshape(-1).astype(jnp.float32)[:1]

    grid_spec = pltpu.PrefetchScalarGridSpec(
        num_scalar_prefetch=2,
        grid=(num_tiles,),
        in_specs=[
            pl.BlockSpec(memory_space=pltpu.MemorySpace.VMEM),  # user table (resident)
            pl.BlockSpec(memory_space=pltpu.MemorySpace.VMEM),  # ad table (resident)
            pl.BlockSpec(memory_space=pltpu.MemorySpace.SMEM),  # fc weight
            pl.BlockSpec(memory_space=pltpu.MemorySpace.SMEM),  # fc bias
        ],
        out_specs=pl.BlockSpec((TB, 1), lambda t, uid_p, aid_p: (t, 0)),
        scratch_shapes=[
            pltpu.VMEM((TB, E), jnp.float32),   # gathered user rows
            pltpu.VMEM((TB, E), jnp.float32),   # gathered ad rows
        ],
    )

    out = pl.pallas_call(
        ad_user_kernel,
        out_shape=jax.ShapeDtypeStruct((B_pad, 1), jnp.float32),
        grid_spec=grid_spec,
        compiler_params=pltpu.CompilerParams(
            dimension_semantics=("parallel",),
            vmem_limit_bytes=32 * 1024 * 1024,
        ),
    )(uid, aid, user_table, ad_table, fcw, fcb)

    return out[:B]                                   # (B, 1)


def _reference_forward(user_ids, ad_ids, user_table, ad_table, fc_w, fc_b):
    """Pure-JAX reference mirroring the PyTorch forward (for validation)."""
    u = user_table[user_ids]            # (B, E)
    a = ad_table[ad_ids]                # (B, E)
    eps = 1e-12
    u = u / jnp.maximum(jnp.linalg.norm(u, axis=1, keepdims=True), eps)
    a = a / jnp.maximum(jnp.linalg.norm(a, axis=1, keepdims=True), eps)
    dot = jnp.sum(u * a, axis=1, keepdims=True)
    return jax.nn.sigmoid(dot * fc_w.reshape(()) + fc_b.reshape(()))


if __name__ == "__main__":
    key = jax.random.PRNGKey(0)
    k_ut, k_at, k_w, k_b, k_ui, k_ai = jax.random.split(key, 6)

    # Small, module-consistent shapes.
    user_length, ad_length, embedding_size = 16, 24, 32
    batch = 8

    # xavier_uniform-style embedding init, Linear(1,1)-style fc init.
    bound_u = (6.0 / (user_length + embedding_size)) ** 0.5
    bound_a = (6.0 / (ad_length + embedding_size)) ** 0.5
    user_table = jax.random.uniform(
        k_ut, (user_length, embedding_size), jnp.float32, -bound_u, bound_u)
    ad_table = jax.random.uniform(
        k_at, (ad_length, embedding_size), jnp.float32, -bound_a, bound_a)
    fc_w = jax.random.uniform(k_w, (1, 1), jnp.float32, -1.0, 1.0)
    fc_b = jax.random.uniform(k_b, (1,), jnp.float32, -1.0, 1.0)

    user_ids = jax.random.randint(k_ui, (batch,), 0, user_length, jnp.int32)
    ad_ids = jax.random.randint(k_ai, (batch,), 0, ad_length, jnp.int32)

    out = ad_user_forward(user_ids, ad_ids, user_table, ad_table, fc_w, fc_b)
    out = jax.block_until_ready(out)

    ref = _reference_forward(user_ids, ad_ids, user_table, ad_table, fc_w, fc_b)
    assert out.shape == (batch, 1), out.shape
    assert jnp.allclose(out, ref, atol=1e-5, rtol=1e-5), (out, ref)

    print("KERNEL_OK")
</pallas_src>

<mosaic_0001>
module attributes {stable_mosaic.version = 11 : i64} {
  func.func @ad_user_kernel(%arg0: i32, %arg1: memref<128xi32, #tpu.memory_space<smem>>, %arg2: memref<128xi32, #tpu.memory_space<smem>>, %arg3: memref<16x32xf32, #tpu.memory_space<vmem>>, %arg4: memref<24x32xf32, #tpu.memory_space<vmem>>, %arg5: memref<1xf32, #tpu.memory_space<smem>>, %arg6: memref<1xf32, #tpu.memory_space<smem>>, %arg7: memref<128x1xf32, #tpu.memory_space<vmem>>, %arg8: memref<128x32xf32, #tpu.memory_space<vmem>>, %arg9: memref<128x32xf32, #tpu.memory_space<vmem>>) attributes {dimension_semantics = [#tpu.dimension_semantics<parallel>], iteration_bounds = array<i64: 1>, scalar_prefetch = 2 : i64, scratch_operands = 2 : i64, tpu.core_type = #tpu.core_type<tc>, window_params = [{pipeline_mode = #tpu.pipeline_mode<synchronous>, transform_indices = @transform_0, window_bounds = array<i64: 16, 32>}, {pipeline_mode = #tpu.pipeline_mode<synchronous>, transform_indices = @transform_1, window_bounds = array<i64: 24, 32>}, {transform_indices = @transform_2, window_bounds = array<i64: 1>}, {transform_indices = @transform_3, window_bounds = array<i64: 1>}, {transform_indices = @transform_4, window_bounds = array<i64: 128, 1>}]} {
    %c128_i32 = arith.constant 128 : i32
    %0 = arith.muli %arg0, %c128_i32 : i32
    %c0_i32 = arith.constant 0 : i32
    %c128_i32_0 = arith.constant 128 : i32
    %1 = arith.addi %c0_i32, %c128_i32_0 : i32
    %c1_i32 = arith.constant 1 : i32
    scf.for %arg10 = %c0_i32 to %1 step %c1_i32  : i32 {
      %c1_i32_14 = arith.constant 1 : i32
      %33 = arith.muli %arg10, %c1_i32_14 : i32
      %c0_i32_15 = arith.constant 0 : i32
      %34 = arith.addi %c0_i32_15, %33 : i32
      %35 = arith.addi %0, %34 : i32
      %36 = arith.index_cast %35 : i32 to index
      %37 = memref.load %arg1[%36] : memref<128xi32, #tpu.memory_space<smem>>
      %38 = arith.addi %0, %34 : i32
      %39 = arith.index_cast %38 : i32 to index
      %40 = memref.load %arg2[%39] : memref<128xi32, #tpu.memory_space<smem>>
      %41 = arith.index_cast %37 : i32 to index
      %c0_16 = arith.constant 0 : index
      %42 = vector.load %arg3[%41, %c0_16] : memref<16x32xf32, #tpu.memory_space<vmem>>, vector<1x32xf32>
      %43 = arith.index_cast %34 : i32 to index
      %c0_17 = arith.constant 0 : index
      %44 = vector.load %arg8[%43, %c0_17] : memref<128x32xf32, #tpu.memory_space<vmem>>, vector<1x32xf32>
      tpu.vector_store %arg8[%43, %c0_17], %42 {strides = array<i32>} : memref<128x32xf32, #tpu.memory_space<vmem>>, vector<1x32xf32>,
      %45 = arith.index_cast %40 : i32 to index
      %c0_18 = arith.constant 0 : index
      %46 = vector.load %arg4[%45, %c0_18] : memref<24x32xf32, #tpu.memory_space<vmem>>, vector<1x32xf32>
      %47 = arith.index_cast %34 : i32 to index
      %c0_19 = arith.constant 0 : index
      %48 = vector.load %arg9[%47, %c0_19] : memref<128x32xf32, #tpu.memory_space<vmem>>, vector<1x32xf32>
      tpu.vector_store %arg9[%47, %c0_19], %46 {strides = array<i32>} : memref<128x32xf32, #tpu.memory_space<vmem>>, vector<1x32xf32>,
    }
    %c128_i32_1 = arith.constant 128 : i32
    %c0 = arith.constant 0 : index
    %c0_2 = arith.constant 0 : index
    %2 = vector.load %arg8[%c0, %c0_2] : memref<128x32xf32, #tpu.memory_space<vmem>>, vector<128x32xf32>
    %c0_3 = arith.constant 0 : index
    %c0_4 = arith.constant 0 : index
    %3 = vector.load %arg9[%c0_3, %c0_4] : memref<128x32xf32, #tpu.memory_space<vmem>>, vector<128x32xf32>
    %4 = arith.mulf %2, %3 : vector<128x32xf32>
    %cst = arith.constant dense<0.000000e+00> : vector<128xf32>
    %5 = vector.multi_reduction <add>, %4, %cst [1] : vector<128x32xf32> to vector<128xf32>
    %6 = vector.shape_cast %5 : vector<128xf32> to vector<128x1xf32>
    %7 = arith.mulf %2, %2 : vector<128x32xf32>
    %cst_5 = arith.constant dense<0.000000e+00> : vector<128xf32>
    %8 = vector.multi_reduction <add>, %7, %cst_5 [1] : vector<128x32xf32> to vector<128xf32>
    %9 = vector.shape_cast %8 : vector<128xf32> to vector<128x1xf32>
    %10 = arith.mulf %3, %3 : vector<128x32xf32>
    %cst_6 = arith.constant dense<0.000000e+00> : vector<128xf32>
    %11 = vector.multi_reduction <add>, %10, %cst_6 [1] : vector<128x32xf32> to vector<128xf32>
    %12 = vector.shape_cast %11 : vector<128xf32> to vector<128x1xf32>
    %cst_7 = arith.constant 1.000000e-24 : f32
    %13 = vector.broadcast %cst_7 : f32 to vector<128x1xf32>
    %14 = arith.maximumf %9, %13 : vector<128x1xf32>
    %15 = math.rsqrt %14 : vector<128x1xf32>
    %cst_8 = arith.constant 1.000000e-24 : f32
    %16 = vector.broadcast %cst_8 : f32 to vector<128x1xf32>
    %17 = arith.maximumf %12, %16 : vector<128x1xf32>
    %18 = math.rsqrt %17 : vector<128x1xf32>
    %19 = arith.mulf %15, %18 : vector<128x1xf32>
    %20 = arith.mulf %6, %19 : vector<128x1xf32>
    %c0_9 = arith.constant 0 : index
    %21 = memref.load %arg5[%c0_9] : memref<1xf32, #tpu.memory_space<smem>>
    %c0_10 = arith.constant 0 : index
    %22 = memref.load %arg6[%c0_10] : memref<1xf32, #tpu.memory_space<smem>>
    %23 = vector.broadcast %21 : f32 to vector<128x1xf32>
    %24 = arith.mulf %20, %23 : vector<128x1xf32>
    %25 = vector.broadcast %22 : f32 to vector<128x1xf32>
    %26 = arith.addf %24, %25 : vector<128x1xf32>
    %27 = arith.negf %26 : vector<128x1xf32>
    %28 = math.exp %27 : vector<128x1xf32>
    %cst_11 = arith.constant 1.000000e+00 : f32
    %29 = vector.broadcast %cst_11 : f32 to vector<128x1xf32>
    %30 = arith.addf %29, %28 : vector<128x1xf32>
    %31 = arith.divf %29, %30 : vector<128x1xf32>
    %c0_12 = arith.constant 0 : index
    %c0_13 = arith.constant 0 : index
    %32 = vector.load %arg7[%c0_12, %c0_13] : memref<128x1xf32, #tpu.memory_space<vmem>>, vector<128x1xf32>
    tpu.vector_store %arg7[%c0_12, %c0_13], %31 {strides = array<i32>} : memref<128x1xf32, #tpu.memory_space<vmem>>, vector<128x1xf32>,
    return
  }
  func.func @transform_0(%arg0: i32, %arg1: memref<128xi32, #tpu.memory_space<smem>>, %arg2: memref<128xi32, #tpu.memory_space<smem>>) -> (i32, i32) {
    %c0_i32 = arith.constant 0 : i32
    %c0_i32_0 = arith.constant 0 : i32
    %c0_i32_1 = arith.constant 0 : i32
    return %c0_i32, %c0_i32_0 : i32, i32
  }
  func.func @transform_1(%arg0: i32, %arg1: memref<128xi32, #tpu.memory_space<smem>>, %arg2: memref<128xi32, #tpu.memory_space<smem>>) -> (i32, i32) {
    %c0_i32 = arith.constant 0 : i32
    %c0_i32_0 = arith.constant 0 : i32
    %c0_i32_1 = arith.constant 0 : i32
    return %c0_i32, %c0_i32_0 : i32, i32
  }
  func.func @transform_2(%arg0: i32, %arg1: memref<128xi32, #tpu.memory_space<smem>>, %arg2: memref<128xi32, #tpu.memory_space<smem>>) -> i32 {
    %c0_i32 = arith.constant 0 : i32
    %c0_i32_0 = arith.constant 0 : i32
    return %c0_i32 : i32
  }
  func.func @transform_3(%arg0: i32, %arg1: memref<128xi32, #tpu.memory_space<smem>>, %arg2: memref<128xi32, #tpu.memory_space<smem>>) -> i32 {
    %c0_i32 = arith.constant 0 : i32
    %c0_i32_0 = arith.constant 0 : i32
    return %c0_i32 : i32
  }
  func.func @transform_4(%arg0: i32, %arg1: memref<128xi32, #tpu.memory_space<smem>>, %arg2: memref<128xi32, #tpu.memory_space<smem>>) -> (i32, i32) {
    %c0_i32 = arith.constant 0 : i32
    %c0_i32_0 = arith.constant 0 : i32
    return %arg0, %c0_i32 : i32, i32
  }
}

</mosaic_0001>

<llo_original>
// kernel: tpu_custom_call.1
$region0: #{tpu_custom_call.1}
  #allocation0 [shape = 'u32[]', space=smem, size = 0x4, offset = 0x4, fixed_abs, tag = 'smem constant byte address 0x4 - core index']
  #allocation1 [shape = 'u32[144,128]{1,0:T(1,128)}', space=vmem, size = 0x12000, scoped, tag = 'internal scratch']
  #allocation2 [shape = 'f32[128,32]{1,0:T(8,128)}', space=vmem, size = 0x10000, scoped, tag = 'scratch operand']
  #allocation3 [shape = 'f32[128,32]{1,0:T(8,128)}', space=vmem, size = 0x10000, scoped, tag = 'scratch operand']
  #allocation4 [shape = 's32[1]{0}', space=sflag, size = 0x4, scoped, tag = 'scoped memory for tpu_custom_call.1']
  #allocation5 [shape = 'u8[512]{0}', space=smem, size = 0x200, scoped, tag = 'prefetched SMEM operand 0']
  #allocation6 [shape = 'u8[512]{0}', space=smem, size = 0x200, scoped, tag = 'prefetched SMEM operand 1']
  #allocation7 [shape = 'f32[1]{0:T(128)S(6)}', space=smem, size = 0x200, scoped, tag = 'scoped memory for tpu_custom_call.1']
  #allocation8 [shape = 'f32[1]{0:T(128)S(6)}', space=smem, size = 0x200, scoped, tag = 'scoped memory for tpu_custom_call.1']
  %s0 = inlined_call_operand.vmem [shape: s32[128], index: 0, kind: input, shape index: {}]
  %s1 = inlined_call_operand.vmem [shape: s32[128], index: 1, kind: input, shape index: {}]
  %s2 = inlined_call_operand.hbm [shape: f32[16,32], index: 2, kind: input, shape index: {}]
  %s3 = inlined_call_operand.hbm [shape: f32[24,32], index: 3, kind: input, shape index: {}]
  %s4 = inlined_call_operand.<no memory space> [shape: f32[1], index: 4, kind: input, shape index: {}]
  %s5 = inlined_call_operand.<no memory space> [shape: f32[1], index: 5, kind: input, shape index: {}]
  %s6 = inlined_call_operand.vmem [shape: f32[128,1], index: 6, kind: output, shape index: {}]
  %s7 = sld [smem:[#allocation0]]
  $region41: #{tpu_custom_call.1} parent=0
    _
  %s9 = ssub.s32 1, %s7
  %s10 = scalar_select 0, %s9, %s7
  %s11 = sshll.u32 %s0, 4
  %s12 = int_to_ptr.vmem [resolvable:$true] %s11
  %14 = dma.vmem_to_smem %s12, 16, [#allocation5], [#allocation4]
  %s15 = sshll.u32 %s1, 4
  %s16 = int_to_ptr.vmem [resolvable:$true] %s15
  %18 = dma.vmem_to_smem %s16, 16, [#allocation6], [#allocation4]
  %19 = sst [smem:[#allocation7]] %s4
  %20 = sst [smem:[#allocation8]] %s5
  %21 = dma.done [#allocation4], 32
  %22 = sfence
  $region1: #{tpu_custom_call.1} parent=0
    #allocation9 [shape = 'u8[8192]{0}', space=vmem, size = 0x2000, scoped, tag = 'input window, operand 2, single buffered']
    #allocation10 [shape = 's32[1]{0}', space=sflag, size = 0x4, scoped, tag = 'scoped memory for tpu_custom_call.1']
    #allocation11 [shape = 'u8[12288]{0}', space=vmem, size = 0x3000, scoped, tag = 'input window, operand 3, single buffered']
    #allocation12 [shape = 's32[1]{0}', space=sflag, size = 0x4, scoped, tag = 'scoped memory for tpu_custom_call.1']
    %23 = vsyncpa [#allocation10], 0
    %24 = vsyncpa [#allocation12], 0
    // Predicated region
    $region2: #{tpu_custom_call.1} parent=1 // pred_check
      _
    $region3: #{tpu_custom_call.1} parent=1 // pred_check_branch
      %26 = sbr.rel (0) target = $region5
    $region4: #{tpu_custom_call.1} parent=1 // pred_region
      %s28 = ssub.s32 256, 256
      %29 = vsyncadd [#allocation10], %s28
      %s30 = sshll.u32 [#allocation9], 4
      %s31 = int_to_ptr.vmem [resolvable:$true] %s30
      %36 = dma.hbm_to_vmem [thread:$0]  %s2, 256, %s31, [#allocation10], 128, 128, 8
    $region5: #{tpu_custom_call.1} parent=1 // pred_fallthru
      _
    // Predicated region
    $region6: #{tpu_custom_call.1} parent=1 // pred_check
      _
    $region7: #{tpu_custom_call.1} parent=1 // pred_check_branch
      %38 = sbr.rel (0) target = $region9
    $region8: #{tpu_custom_call.1} parent=1 // pred_region
      %s40 = ssub.s32 384, 384
      %41 = vsyncadd [#allocation12], %s40
      %s42 = sshll.u32 [#allocation11], 4
      %s43 = int_to_ptr.vmem [resolvable:$true] %s42
      %48 = dma.hbm_to_vmem [thread:$0]  %s3, 384, %s43, [#allocation12], 128, 128, 8
    $region9: #{tpu_custom_call.1} parent=1 // pred_fallthru
      _
    // Predicated region
    $region10: #{tpu_custom_call.1} parent=1 // pred_check
      _
    $region11: #{tpu_custom_call.1} parent=1 // pred_check_branch
      %50 = sbr.rel (0) target = $region13
    $region12: #{tpu_custom_call.1} parent=1 // pred_region
      _
    $region13: #{tpu_custom_call.1} parent=1 // pred_fallthru
      _
    // Predicated region
    $region14: #{tpu_custom_call.1} parent=1 // pred_check
      _
    $region15: #{tpu_custom_call.1} parent=1 // pred_check_branch
      %52 = sbr.rel (0) target = $region17
    $region16: #{tpu_custom_call.1} parent=1 // pred_region
      _
    $region17: #{tpu_custom_call.1} parent=1 // pred_fallthru
      _
    // Predicated region
    $region18: #{tpu_custom_call.1} parent=1 // pred_check
      _
    $region19: #{tpu_custom_call.1} parent=1 // pred_check_branch
      %54 = sbr.rel (0) target = $region21
    $region20: #{tpu_custom_call.1} parent=1 // pred_region
      %55 = dma.done [#allocation10], 256
    $region21: #{tpu_custom_call.1} parent=1 // pred_fallthru
      _
    // Predicated region
    $region22: #{tpu_custom_call.1} parent=1 // pred_check
      _
    $region23: #{tpu_custom_call.1} parent=1 // pred_check_branch
      %57 = sbr.rel (0) target = $region25
    $region24: #{tpu_custom_call.1} parent=1 // pred_region
      %58 = dma.done [#allocation12], 384
    $region25: #{tpu_custom_call.1} parent=1 // pred_fallthru
      _
    %s59 = smul.u32 0, 128
    loop: start=0, step=1, limit=128
    $region26: #{tpu_custom_call.1} parent=1 // loop_pre_header
      _
    $region27: #{tpu_custom_call.1} parent=1 // loop_header
      %s61 = sphi 0, %s65
      %p62 = scmp.ge.s32.totalorder %s61, 128
    $region28: #{tpu_custom_call.1} parent=1 // loop_header_branch
      %64 = sbr.rel (%p62) target = $region32
    $region29: #{tpu_custom_call.1} parent=1 // loop_body
      %s66 = sadd.s32 %s59, %s61
      %s67 = sld [smem:[#allocation5 + %s66]]
      %s68 = sld [smem:[#allocation6 + %s66]]
      %s69 = scalar_lea.vmem [#allocation9], %s67
      %v70 = vld [vmem:[%s69] sm:$0x1]
      %s71 = scalar_lea.vmem [#allocation2], %s61
      %vm72 = vcmask 253952
      %73 = vst.msk [vmem:[%s71] sm:$0x1] %vm72, %v70
      %s74 = scalar_lea.vmem [#allocation11], %s68
      %v75 = vld [vmem:[%s74] sm:$0x1]
      %s76 = scalar_lea.vmem [#allocation3], %s61
      %77 = vst.msk [vmem:[%s76] sm:$0x1] %vm72, %v75
    $region30: #{tpu_custom_call.1} parent=1 // loop_footer
      %s65 = sadd.s32 1, %s61
    $region31: #{tpu_custom_call.1} parent=1 // loop_footer_branch
      %60 = sbr.rel target = $region27
    $region32: #{tpu_custom_call.1} parent=1 // loop_exit
      _
    %v78 = vld [vmem:[#allocation2] sm:$0xff]
    %v79 = vld [vmem:[#allocation2 + $0x8] sm:$0xff]
    %v80 = vld [vmem:[#allocation2 + $0x10] sm:$0xff]
    %v81 = vld [vmem:[#allocation2 + $0x18] sm:$0xff]
    %v82 = vld [vmem:[#allocation2 + $0x20] sm:$0xff]
    %v83 = vld [vmem:[#allocation2 + $0x28] sm:$0xff]
    %v84 = vld [vmem:[#allocation2 + $0x30] sm:$0xff]
    %v85 = vld [vmem:[#allocation2 + $0x38] sm:$0xff]
    %v86 = vld [vmem:[#allocation2 + $0x40] sm:$0xff]
    %v87 = vld [vmem:[#allocation2 + $0x48] sm:$0xff]
    %v88 = vld [vmem:[#allocation2 + $0x50] sm:$0xff]
    %v89 = vld [vmem:[#allocation2 + $0x58] sm:$0xff]
    %v90 = vld [vmem:[#allocation2 + $0x60] sm:$0xff]
    %v91 = vld [vmem:[#allocation2 + $0x68] sm:$0xff]
    %v92 = vld [vmem:[#allocation2 + $0x70] sm:$0xff]
    %v93 = vld [vmem:[#allocation2 + $0x78] sm:$0xff]
    %v94 = vld [vmem:[#allocation3] sm:$0xff]
    %v95 = vld [vmem:[#allocation3 + $0x8] sm:$0xff]
    %v96 = vld [vmem:[#allocation3 + $0x10] sm:$0xff]
    %v97 = vld [vmem:[#allocation3 + $0x18] sm:$0xff]
    %v98 = vld [vmem:[#allocation3 + $0x20] sm:$0xff]
    %v99 = vld [vmem:[#allocation3 + $0x28] sm:$0xff]
    %v100 = vld [vmem:[#allocation3 + $0x30] sm:$0xff]
    %v101 = vld [vmem:[#allocation3 + $0x38] sm:$0xff]
    %v102 = vld [vmem:[#allocation3 + $0x40] sm:$0xff]
    %v103 = vld [vmem:[#allocation3 + $0x48] sm:$0xff]
    %v104 = vld [vmem:[#allocation3 + $0x50] sm:$0xff]
    %v105 = vld [vmem:[#allocation3 + $0x58] sm:$0xff]
    %v106 = vld [vmem:[#allocation3 + $0x60] sm:$0xff]
    %v107 = vld [vmem:[#allocation3 + $0x68] sm:$0xff]
    %v108 = vld [vmem:[#allocation3 + $0x70] sm:$0xff]
    %v109 = vld [vmem:[#allocation3 + $0x78] sm:$0xff]
    %v110 = vmul.f32 %v78, %v94
    %v111 = vmul.f32 %v79, %v95
    %v112 = vmul.f32 %v80, %v96
    %v113 = vmul.f32 %v81, %v97
    %v114 = vmul.f32 %v82, %v98
    %v115 = vmul.f32 %v83, %v99
    %v116 = vmul.f32 %v84, %v100
    %v117 = vmul.f32 %v85, %v101
    %v118 = vmul.f32 %v86, %v102
    %v119 = vmul.f32 %v87, %v103
    %v120 = vmul.f32 %v88, %v104
    %v121 = vmul.f32 %v89, %v105
    %v122 = vmul.f32 %v90, %v106
    %v123 = vmul.f32 %v91, %v107
    %v124 = vmul.f32 %v92, %v108
    %v125 = vmul.f32 %v93, %v109
    %vm126 = vcmask 261120
    %v127 = vsel %vm126, %v110, 0.0
    %128 = vadd.xlane.f32.xlu0 %v127
    %v129 = vpop.xlane.xlu0 %128
    %v130 = vsel %vm126, %v111, 0.0
    %131 = vadd.xlane.f32.xlu0 %v130
    %v132 = vpop.xlane.xlu0 %131
    %v133 = vsel %vm126, %v112, 0.0
    %134 = vadd.xlane.f32.xlu0 %v133
    %v135 = vpop.xlane.xlu0 %134
    %v136 = vsel %vm126, %v113, 0.0
    %137 = vadd.xlane.f32.xlu0 %v136
    %v138 = vpop.xlane.xlu0 %137
    %v139 = vsel %vm126, %v114, 0.0
    %140 = vadd.xlane.f32.xlu0 %v139
    %v141 = vpop.xlane.xlu0 %140
    %v142 = vsel %vm126, %v115, 0.0
    %143 = vadd.xlane.f32.xlu0 %v142
    %v144 = vpop.xlane.xlu0 %143
    %v145 = vsel %vm126, %v116, 0.0
    %146 = vadd.xlane.f32.xlu0 %v145
    %v147 = vpop.xlane.xlu0 %146
    %v148 = vsel %vm126, %v117, 0.0
    %149 = vadd.xlane.f32.xlu0 %v148
    %v150 = vpop.xlane.xlu0 %149
    %v151 = vsel %vm126, %v118, 0.0
    %152 = vadd.xlane.f32.xlu0 %v151
    %v153 = vpop.xlane.xlu0 %152
    %v154 = vsel %vm126, %v119, 0.0
    %155 = vadd.xlane.f32.xlu0 %v154
    %v156 = vpop.xlane.xlu0 %155
    %v157 = vsel %vm126, %v120, 0.0
    %158 = vadd.xlane.f32.xlu0 %v157
    %v159 = vpop.xlane.xlu0 %158
    %v160 = vsel %vm126, %v121, 0.0
    %161 = vadd.xlane.f32.xlu0 %v160
    %v162 = vpop.xlane.xlu0 %161
    %v163 = vsel %vm126, %v122, 0.0
    %164 = vadd.xlane.f32.xlu0 %v163
    %v165 = vpop.xlane.xlu0 %164
    %v166 = vsel %vm126, %v123, 0.0
    %167 = vadd.xlane.f32.xlu0 %v166
    %v168 = vpop.xlane.xlu0 %167
    %v169 = vsel %vm126, %v124, 0.0
    %170 = vadd.xlane.f32.xlu0 %v169
    %v171 = vpop.xlane.xlu0 %170
    %v172 = vsel %vm126, %v125, 0.0
    %173 = vadd.xlane.f32.xlu0 %v172
    %v174 = vpop.xlane.xlu0 %173
    %v175 = vmul.f32 %v78, %v78
    %v176 = vmul.f32 %v79, %v79
    %v177 = vmul.f32 %v80, %v80
    %v178 = vmul.f32 %v81, %v81
    %v179 = vmul.f32 %v82, %v82
    %v180 = vmul.f32 %v83, %v83
    %v181 = vmul.f32 %v84, %v84
    %v182 = vmul.f32 %v85, %v85
    %v183 = vmul.f32 %v86, %v86
    %v184 = vmul.f32 %v87, %v87
    %v185 = vmul.f32 %v88, %v88
    %v186 = vmul.f32 %v89, %v89
    %v187 = vmul.f32 %v90, %v90
    %v188 = vmul.f32 %v91, %v91
    %v189 = vmul.f32 %v92, %v92
    %v190 = vmul.f32 %v93, %v93
    %v191 = vsel %vm126, %v175, 0.0
    %192 = vadd.xlane.f32.xlu0 %v191
    %v193 = vpop.xlane.xlu0 %192
    %v194 = vsel %vm126, %v176, 0.0
    %195 = vadd.xlane.f32.xlu0 %v194
    %v196 = vpop.xlane.xlu0 %195
    %v197 = vsel %vm126, %v177, 0.0
    %198 = vadd.xlane.f32.xlu0 %v197
    %v199 = vpop.xlane.xlu0 %198
    %v200 = vsel %vm126, %v178, 0.0
    %201 = vadd.xlane.f32.xlu0 %v200
    %v202 = vpop.xlane.xlu0 %201
    %v203 = vsel %vm126, %v179, 0.0
    %204 = vadd.xlane.f32.xlu0 %v203
    %v205 = vpop.xlane.xlu0 %204
    %v206 = vsel %vm126, %v180, 0.0
    %207 = vadd.xlane.f32.xlu0 %v206
    %v208 = vpop.xlane.xlu0 %207
    %v209 = vsel %vm126, %v181, 0.0
    %210 = vadd.xlane.f32.xlu0 %v209
    %v211 = vpop.xlane.xlu0 %210
    %v212 = vsel %vm126, %v182, 0.0
    %213 = vadd.xlane.f32.xlu0 %v212
    %v214 = vpop.xlane.xlu0 %213
    %v215 = vsel %vm126, %v183, 0.0
    %216 = vadd.xlane.f32.xlu0 %v215
    %v217 = vpop.xlane.xlu0 %216
    %v218 = vsel %vm126, %v184, 0.0
    %219 = vadd.xlane.f32.xlu0 %v218
    %v220 = vpop.xlane.xlu0 %219
    %v221 = vsel %vm126, %v185, 0.0
    %222 = vadd.xlane.f32.xlu0 %v221
    %v223 = vpop.xlane.xlu0 %222
    %v224 = vsel %vm126, %v186, 0.0
    %225 = vadd.xlane.f32.xlu0 %v224
    %v226 = vpop.xlane.xlu0 %225
    %v227 = vsel %vm126, %v187, 0.0
    %228 = vadd.xlane.f32.xlu0 %v227
    %v229 = vpop.xlane.xlu0 %228
    %v230 = vsel %vm126, %v188, 0.0
    %231 = vadd.xlane.f32.xlu0 %v230
    %v232 = vpop.xlane.xlu0 %231
    %v233 = vsel %vm126, %v189, 0.0
    %234 = vadd.xlane.f32.xlu0 %v233
    %v235 = vpop.xlane.xlu0 %234
    %v236 = vsel %vm126, %v190, 0.0
    %237 = vadd.xlane.f32.xlu0 %v236
    %v238 = vpop.xlane.xlu0 %237
    %v239 = vmul.f32 %v94, %v94
    %v240 = vmul.f32 %v95, %v95
    %v241 = vmul.f32 %v96, %v96
    %v242 = vmul.f32 %v97, %v97
    %v243 = vmul.f32 %v98, %v98
    %v244 = vmul.f32 %v99, %v99
    %v245 = vmul.f32 %v100, %v100
    %v246 = vmul.f32 %v101, %v101
    %v247 = vmul.f32 %v102, %v102
    %v248 = vmul.f32 %v103, %v103
    %v249 = vmul.f32 %v104, %v104
    %v250 = vmul.f32 %v105, %v105
    %v251 = vmul.f32 %v106, %v106
    %v252 = vmul.f32 %v107, %v107
    %v253 = vmul.f32 %v108, %v108
    %v254 = vmul.f32 %v109, %v109
    %v255 = vsel %vm126, %v239, 0.0
    %256 = vadd.xlane.f32.xlu0 %v255
    %v257 = vpop.xlane.xlu0 %256
    %v258 = vsel %vm126, %v240, 0.0
    %259 = vadd.xlane.f32.xlu0 %v258
    %v260 = vpop.xlane.xlu0 %259
    %v261 = vsel %vm126, %v241, 0.0
    %262 = vadd.xlane.f32.xlu0 %v261
    %v263 = vpop.xlane.xlu0 %262
    %v264 = vsel %vm126, %v242, 0.0
    %265 = vadd.xlane.f32.xlu0 %v264
    %v266 = vpop.xlane.xlu0 %265
    %v267 = vsel %vm126, %v243, 0.0
    %268 = vadd.xlane.f32.xlu0 %v267
    %v269 = vpop.xlane.xlu0 %268
    %v270 = vsel %vm126, %v244, 0.0
    %271 = vadd.xlane.f32.xlu0 %v270
    %v272 = vpop.xlane.xlu0 %271
    %v273 = vsel %vm126, %v245, 0.0
    %274 = vadd.xlane.f32.xlu0 %v273
    %v275 = vpop.xlane.xlu0 %274
    %v276 = vsel %vm126, %v246, 0.0
    %277 = vadd.xlane.f32.xlu0 %v276
    %v278 = vpop.xlane.xlu0 %277
    %v279 = vsel %vm126, %v247, 0.0
    %280 = vadd.xlane.f32.xlu0 %v279
    %v281 = vpop.xlane.xlu0 %280
    %v282 = vsel %vm126, %v248, 0.0
    %283 = vadd.xlane.f32.xlu0 %v282
    %v284 = vpop.xlane.xlu0 %283
    %v285 = vsel %vm126, %v249, 0.0
    %286 = vadd.xlane.f32.xlu0 %v285
    %v287 = vpop.xlane.xlu0 %286
    %v288 = vsel %vm126, %v250, 0.0
    %289 = vadd.xlane.f32.xlu0 %v288
    %v290 = vpop.xlane.xlu0 %289
    %v291 = vsel %vm126, %v251, 0.0
    %292 = vadd.xlane.f32.xlu0 %v291
    %v293 = vpop.xlane.xlu0 %292
    %v294 = vsel %vm126, %v252, 0.0
    %295 = vadd.xlane.f32.xlu0 %v294
    %v296 = vpop.xlane.xlu0 %295
    %v297 = vsel %vm126, %v253, 0.0
    %298 = vadd.xlane.f32.xlu0 %v297
    %v299 = vpop.xlane.xlu0 %298
    %v300 = vsel %vm126, %v254, 0.0
    %301 = vadd.xlane.f32.xlu0 %v300
    %v302 = vpop.xlane.xlu0 %301
    %v303 = vmax.f32 %v193, 1e-24
    %v304 = vmax.f32 %v196, 1e-24
    %v305 = vmax.f32 %v199, 1e-24
    %v306 = vmax.f32 %v202, 1e-24
    %v307 = vmax.f32 %v205, 1e-24
    %v308 = vmax.f32 %v208, 1e-24
    %v309 = vmax.f32 %v211, 1e-24
    %v310 = vmax.f32 %v214, 1e-24
    %v311 = vmax.f32 %v217, 1e-24
    %v312 = vmax.f32 %v220, 1e-24
    %v313 = vmax.f32 %v223, 1e-24
    %v314 = vmax.f32 %v226, 1e-24
    %v315 = vmax.f32 %v229, 1e-24
    %v316 = vmax.f32 %v232, 1e-24
    %v317 = vmax.f32 %v235, 1e-24
    %v318 = vmax.f32 %v238, 1e-24
    %v319 = vrsqrt.pop %v303
    %v320 = vrsqrt.pop %v304
    %v321 = vrsqrt.pop %v305
    %v322 = vrsqrt.pop %v306
    %v323 = vrsqrt.pop %v307
    %v324 = vrsqrt.pop %v308
    %v325 = vrsqrt.pop %v309
    %v326 = vrsqrt.pop %v310
    %v327 = vrsqrt.pop %v311
    %v328 = vrsqrt.pop %v312
    %v329 = vrsqrt.pop %v313
    %v330 = vrsqrt.pop %v314
    %v331 = vrsqrt.pop %v315
    %v332 = vrsqrt.pop %v316
    %v333 = vrsqrt.pop %v317
    %v334 = vrsqrt.pop %v318
    %v335 = vmax.f32 %v257, 1e-24
    %v336 = vmax.f32 %v260, 1e-24
    %v337 = vmax.f32 %v263, 1e-24
    %v338 = vmax.f32 %v266, 1e-24
    %v339 = vmax.f32 %v269, 1e-24
    %v340 = vmax.f32 %v272, 1e-24
    %v341 = vmax.f32 %v275, 1e-24
    %v342 = vmax.f32 %v278, 1e-24
    %v343 = vmax.f32 %v281, 1e-24
    %v344 = vmax.f32 %v284, 1e-24
    %v345 = vmax.f32 %v287, 1e-24
    %v346 = vmax.f32 %v290, 1e-24
    %v347 = vmax.f32 %v293, 1e-24
    %v348 = vmax.f32 %v296, 1e-24
    %v349 = vmax.f32 %v299, 1e-24
    %v350 = vmax.f32 %v302, 1e-24
    %v351 = vrsqrt.pop %v335
    %v352 = vrsqrt.pop %v336
    %v353 = vrsqrt.pop %v337
    %v354 = vrsqrt.pop %v338
    %v355 = vrsqrt.pop %v339
    %v356 = vrsqrt.pop %v340
    %v357 = vrsqrt.pop %v341
    %v358 = vrsqrt.pop %v342
    %v359 = vrsqrt.pop %v343
    %v360 = vrsqrt.pop %v344
    %v361 = vrsqrt.pop %v345
    %v362 = vrsqrt.pop %v346
    %v363 = vrsqrt.pop %v347
    %v364 = vrsqrt.pop %v348
    %v365 = vrsqrt.pop %v349
    %v366 = vrsqrt.pop %v350
    %v367 = vmul.f32 %v319, %v351
    %v368 = vmul.f32 %v320, %v352
    %v369 = vmul.f32 %v321, %v353
    %v370 = vmul.f32 %v322, %v354
    %v371 = vmul.f32 %v323, %v355
    %v372 = vmul.f32 %v324, %v356
    %v373 = vmul.f32 %v325, %v357
    %v374 = vmul.f32 %v326, %v358
    %v375 = vmul.f32 %v327, %v359
    %v376 = vmul.f32 %v328, %v360
    %v377 = vmul.f32 %v329, %v361
    %v378 = vmul.f32 %v330, %v362
    %v379 = vmul.f32 %v331, %v363
    %v380 = vmul.f32 %v332, %v364
    %v381 = vmul.f32 %v333, %v365
    %v382 = vmul.f32 %v334, %v366
    %v383 = vmul.f32 %v129, %v367
    %v384 = vmul.f32 %v132, %v368
    %v385 = vmul.f32 %v135, %v369
    %v386 = vmul.f32 %v138, %v370
    %v387 = vmul.f32 %v141, %v371
    %v388 = vmul.f32 %v144, %v372
    %v389 = vmul.f32 %v147, %v373
    %v390 = vmul.f32 %v150, %v374
    %v391 = vmul.f32 %v153, %v375
    %v392 = vmul.f32 %v156, %v376
    %v393 = vmul.f32 %v159, %v377
    %v394 = vmul.f32 %v162, %v378
    %v395 = vmul.f32 %v165, %v379
    %v396 = vmul.f32 %v168, %v380
    %v397 = vmul.f32 %v171, %v381
    %v398 = vmul.f32 %v174, %v382
    %s399 = sld [smem:[#allocation7]]
    %s400 = sld [smem:[#allocation8]]
    %v401 = vstv %s399
    %v402 = vmul.f32 %v383, %v401
    %v403 = vmul.f32 %v384, %v401
    %v404 = vmul.f32 %v385, %v401
    %v405 = vmul.f32 %v386, %v401
    %v406 = vmul.f32 %v387, %v401
    %v407 = vmul.f32 %v388, %v401
    %v408 = vmul.f32 %v389, %v401
    %v409 = vmul.f32 %v390, %v401
    %v410 = vmul.f32 %v391, %v401
    %v411 = vmul.f32 %v392, %v401
    %v412 = vmul.f32 %v393, %v401
    %v413 = vmul.f32 %v394, %v401
    %v414 = vmul.f32 %v395, %v401
    %v415 = vmul.f32 %v396, %v401
    %v416 = vmul.f32 %v397, %v401
    %v417 = vmul.f32 %v398, %v401
    %v418 = vstv %s400
    %v419 = vadd.f32 %v402, %v418
    %v420 = vadd.f32 %v403, %v418
    %v421 = vadd.f32 %v404, %v418
    %v422 = vadd.f32 %v405, %v418
    %v423 = vadd.f32 %v406, %v418
    %v424 = vadd.f32 %v407, %v418
    %v425 = vadd.f32 %v408, %v418
    %v426 = vadd.f32 %v409, %v418
    %v427 = vadd.f32 %v410, %v418
    %v428 = vadd.f32 %v411, %v418
    %v429 = vadd.f32 %v412, %v418
    %v430 = vadd.f32 %v413, %v418
    %v431 = vadd.f32 %v414, %v418
    %v432 = vadd.f32 %v415, %v418
    %v433 = vadd.f32 %v416, %v418
    %v434 = vadd.f32 %v417, %v418
    %v435 = vxor.u32 %v419, 2147483648
    %v436 = vxor.u32 %v420, 2147483648
    %v437 = vxor.u32 %v421, 2147483648
    %v438 = vxor.u32 %v422, 2147483648
    %v439 = vxor.u32 %v423, 2147483648
    %v440 = vxor.u32 %v424, 2147483648
    %v441 = vxor.u32 %v425, 2147483648
    %v442 = vxor.u32 %v426, 2147483648
    %v443 = vxor.u32 %v427, 2147483648
    %v444 = vxor.u32 %v428, 2147483648
    %v445 = vxor.u32 %v429, 2147483648
    %v446 = vxor.u32 %v430, 2147483648
    %v447 = vxor.u32 %v431, 2147483648
    %v448 = vxor.u32 %v432, 2147483648
    %v449 = vxor.u32 %v433, 2147483648
    %v450 = vxor.u32 %v434, 2147483648
    %v451 = vmul.f32 %v435, 1.442695
    %v452 = vpow.pop %v451
    %v453 = vmul.f32 %v436, 1.442695
    %v454 = vpow.pop %v453
    %v455 = vmul.f32 %v437, 1.442695
    %v456 = vpow.pop %v455
    %v457 = vmul.f32 %v438, 1.442695
    %v458 = vpow.pop %v457
    %v459 = vmul.f32 %v439, 1.442695
    %v460 = vpow.pop %v459
    %v461 = vmul.f32 %v440, 1.442695
    %v462 = vpow.pop %v461
    %v463 = vmul.f32 %v441, 1.442695
    %v464 = vpow.pop %v463
    %v465 = vmul.f32 %v442, 1.442695
    %v466 = vpow.pop %v465
    %v467 = vmul.f32 %v443, 1.442695
    %v468 = vpow.pop %v467
    %v469 = vmul.f32 %v444, 1.442695
    %v470 = vpow.pop %v469
    %v471 = vmul.f32 %v445, 1.442695
    %v472 = vpow.pop %v471
    %v473 = vmul.f32 %v446, 1.442695
    %v474 = vpow.pop %v473
    %v475 = vmul.f32 %v447, 1.442695
    %v476 = vpow.pop %v475
    %v477 = vmul.f32 %v448, 1.442695
    %v478 = vpow.pop %v477
    %v479 = vmul.f32 %v449, 1.442695
    %v480 = vpow.pop %v479
    %v481 = vmul.f32 %v450, 1.442695
    %v482 = vpow.pop %v481
    %v483 = vadd.f32 %v452, 1.0
    %v484 = vadd.f32 %v454, 1.0
    %v485 = vadd.f32 %v456, 1.0
    %v486 = vadd.f32 %v458, 1.0
    %v487 = vadd.f32 %v460, 1.0
    %v488 = vadd.f32 %v462, 1.0
    %v489 = vadd.f32 %v464, 1.0
    %v490 = vadd.f32 %v466, 1.0
    %v491 = vadd.f32 %v468, 1.0
    %v492 = vadd.f32 %v470, 1.0
    %v493 = vadd.f32 %v472, 1.0
    %v494 = vadd.f32 %v474, 1.0
    %v495 = vadd.f32 %v476, 1.0
    %v496 = vadd.f32 %v478, 1.0
    %v497 = vadd.f32 %v480, 1.0
    %v498 = vadd.f32 %v482, 1.0
    %v499 = vrcp.pop %v483
    %v500 = vmul.f32 1.0, %v499
    %v501 = vrcp.pop %v484
    %v502 = vmul.f32 1.0, %v501
    %v503 = vrcp.pop %v485
    %v504 = vmul.f32 1.0, %v503
    %v505 = vrcp.pop %v486
    %v506 = vmul.f32 1.0, %v505
    %v507 = vrcp.pop %v487
    %v508 = vmul.f32 1.0, %v507
    %v509 = vrcp.pop %v488
    %v510 = vmul.f32 1.0, %v509
    %v511 = vrcp.pop %v489
    %v512 = vmul.f32 1.0, %v511
    %v513 = vrcp.pop %v490
    %v514 = vmul.f32 1.0, %v513
    %v515 = vrcp.pop %v491
    %v516 = vmul.f32 1.0, %v515
    %v517 = vrcp.pop %v492
    %v518 = vmul.f32 1.0, %v517
    %v519 = vrcp.pop %v493
    %v520 = vmul.f32 1.0, %v519
    %v521 = vrcp.pop %v494
    %v522 = vmul.f32 1.0, %v521
    %v523 = vrcp.pop %v495
    %v524 = vmul.f32 1.0, %v523
    %v525 = vrcp.pop %v496
    %v526 = vmul.f32 1.0, %v525
    %v527 = vrcp.pop %v497
    %v528 = vmul.f32 1.0, %v527
    %v529 = vrcp.pop %v498
    %v530 = vmul.f32 1.0, %v529
    %vm531 = vcmask 7168
    %532 = vst.msk [vmem:[%s6] sm:$0xff] %vm531, %v500
    %533 = vst.msk [vmem:[%s6 + $0x8] sm:$0xff] %vm531, %v502
    %534 = vst.msk [vmem:[%s6 + $0x10] sm:$0xff] %vm531, %v504
    %535 = vst.msk [vmem:[%s6 + $0x18] sm:$0xff] %vm531, %v506
    %536 = vst.msk [vmem:[%s6 + $0x20] sm:$0xff] %vm531, %v508
    %537 = vst.msk [vmem:[%s6 + $0x28] sm:$0xff] %vm531, %v510
    %538 = vst.msk [vmem:[%s6 + $0x30] sm:$0xff] %vm531, %v512
    %539 = vst.msk [vmem:[%s6 + $0x38] sm:$0xff] %vm531, %v514
    %540 = vst.msk [vmem:[%s6 + $0x40] sm:$0xff] %vm531, %v516
    %541 = vst.msk [vmem:[%s6 + $0x48] sm:$0xff] %vm531, %v518
    %542 = vst.msk [vmem:[%s6 + $0x50] sm:$0xff] %vm531, %v520
    %543 = vst.msk [vmem:[%s6 + $0x58] sm:$0xff] %vm531, %v522
    %544 = vst.msk [vmem:[%s6 + $0x60] sm:$0xff] %vm531, %v524
    %545 = vst.msk [vmem:[%s6 + $0x68] sm:$0xff] %vm531, %v526
    %546 = vst.msk [vmem:[%s6 + $0x70] sm:$0xff] %vm531, %v528
    %547 = vst.msk [vmem:[%s6 + $0x78] sm:$0xff] %vm531, %v530
    // Predicated region
    $region33: #{tpu_custom_call.1} parent=1 // pred_check
      _
    $region34: #{tpu_custom_call.1} parent=1 // pred_check_branch
      %549 = sbr.rel (0) target = $region36
    $region35: #{tpu_custom_call.1} parent=1 // pred_region
      _
    $region36: #{tpu_custom_call.1} parent=1 // pred_fallthru
      _
    // Predicated region
    $region37: #{tpu_custom_call.1} parent=1 // pred_check
      _
    $region38: #{tpu_custom_call.1} parent=1 // pred_check_branch
      %551 = sbr.rel (0) target = $region40
    $region39: #{tpu_custom_call.1} parent=1 // pred_region
      _
    $region40: #{tpu_custom_call.1} parent=1 // pred_fallthru
      _
    %552 = vsyncpa [#allocation10], 1
    %553 = vsyncpa [#allocation12], 1

</llo_original>
